<compile_context>
chip_gen: v5e
topology: v5e:2x2
jax: 0.10.0
libtpu: 0.0.40
codegen_flags: <defaults>
</compile_context>

<pallas_src>
import functools

import jax
import jax.numpy as jnp
from jax.experimental import pallas as pl
from jax.experimental.pallas import tpu as pltpu


def _linear_dropout_kernel(x_ref, w_ref, b_ref, rnd_ref, o_ref, *, p, training):
    # x_ref:   (M, K) f32   VMEM
    # w_ref:   (1, K) f32   VMEM   (PyTorch (N, K) layout, N == 1)
    # b_ref:   (1,)   f32   SMEM   (scalar bias)
    # rnd_ref: (M, 1) u32   VMEM   (dropout random bits; unused in eval mode)
    # o_ref:   (M, 1) f32   VMEM
    #
    # VPU multiply + XLU lane-reduction instead of an MXU matmul (N == 1).
    y = jnp.sum(x_ref[...] * w_ref[...], axis=-1, keepdims=True)  # (M, 1) f32
    y = y + b_ref[0]

    if training and p > 0.0:
        # Integer-domain keep test: P(drop) = threshold / 2^32 == p.
        threshold = jnp.uint32(min(int(round(p * (2 ** 32))), 2 ** 32 - 1))
        keep = rnd_ref[...] >= threshold
        y = jnp.where(keep, y * (1.0 / (1.0 - p)), jnp.float32(0.0))

    o_ref[...] = y.astype(o_ref.dtype)


def linear_dropout_forward(x, weight, bias, *, p=0.4, training=False,
                           rng_key=None):
    """x: (M, K); weight: (N, K) [PyTorch layout, N must be 1]; bias: (N,).

    Returns (M, N).  `rng_key` is only used when training=True and p > 0.
    """
    M, K = x.shape
    N, K2 = weight.shape
    assert K == K2 and N == 1, (x.shape, weight.shape)

    if training and p > 0.0:
        if rng_key is None:
            rng_key = jax.random.PRNGKey(0)
        rnd = jax.random.bits(rng_key, (M, N), dtype=jnp.uint32)
    else:
        rnd = jnp.zeros((M, N), dtype=jnp.uint32)

    kernel = functools.partial(_linear_dropout_kernel, p=float(p),
                               training=bool(training))

    # No grid: a single whole-array kernel invocation (no pipeline overhead).
    return pl.pallas_call(
        kernel,
        out_shape=jax.ShapeDtypeStruct((M, N), x.dtype),
        in_specs=[
            pl.BlockSpec(memory_space=pltpu.MemorySpace.VMEM),   # x
            pl.BlockSpec(memory_space=pltpu.MemorySpace.VMEM),   # weight (1, K)
            pl.BlockSpec(memory_space=pltpu.MemorySpace.SMEM),   # bias scalar
            pl.BlockSpec(memory_space=pltpu.MemorySpace.VMEM),   # dropout bits
        ],
        out_specs=pl.BlockSpec(memory_space=pltpu.MemorySpace.VMEM),
    )(x, weight, bias, rnd)


if __name__ == "__main__":
    key = jax.random.PRNGKey(0)
    k_x, k_w, k_b, k_drop = jax.random.split(key, 4)

    IN_FEATURES, OUT_FEATURES, BATCH = 12, 1, 10

    # Deterministic parameter init (PyTorch-style uniform(-1/sqrt(fan_in), .)).
    bound = 1.0 / float(IN_FEATURES) ** 0.5
    weight = jax.random.uniform(k_w, (OUT_FEATURES, IN_FEATURES),
                                dtype=jnp.float32, minval=-bound, maxval=bound)
    bias = jax.random.uniform(k_b, (OUT_FEATURES,),
                              dtype=jnp.float32, minval=-bound, maxval=bound)
    x = jax.random.normal(k_x, (BATCH, IN_FEATURES), dtype=jnp.float32)

    # Eval-mode forward (dropout = identity): deterministic check vs JAX ref.
    out = linear_dropout_forward(x, weight, bias, p=0.4, training=False)
    out = jax.block_until_ready(out)

    ref = x @ weight.T + bias
    assert out.shape == (BATCH, OUT_FEATURES), out.shape
    assert jnp.allclose(out, ref, atol=1e-5, rtol=1e-5), "mismatch vs reference"

    # Training-mode forward (exercises the in-kernel dropout mask + scaling).
    out_train = linear_dropout_forward(x, weight, bias, p=0.4,
                                       training=True, rng_key=k_drop)
    out_train = jax.block_until_ready(out_train)

    # Each output element is either exactly 0 or ref / (1 - p).
    scaled = ref / (1.0 - 0.4)
    ok = jnp.all(jnp.isclose(out_train, 0.0, atol=1e-6) |
                 jnp.isclose(out_train, scaled, atol=1e-4, rtol=1e-4))
    assert bool(ok), "dropout output not consistent with keep/drop semantics"

    print("KERNEL_OK")
</pallas_src>

<mosaic_0001>
module attributes {stable_mosaic.version = 11 : i64} {
  func.func @_linear_dropout_kernel(%arg0: memref<10x12xf32, #tpu.memory_space<vmem>>, %arg1: memref<1x12xf32, #tpu.memory_space<vmem>>, %arg2: memref<1xf32, #tpu.memory_space<smem>>, %arg3: memref<10x1xi32, #tpu.memory_space<vmem>>, %arg4: memref<10x1xf32, #tpu.memory_space<vmem>>) attributes {dimension_semantics = [], scalar_prefetch = 0 : i64, scratch_operands = 0 : i64, tpu.core_type = #tpu.core_type<tc>} {
    %c0 = arith.constant 0 : index
    %c0_0 = arith.constant 0 : index
    %0 = vector.load %arg0[%c0, %c0_0] : memref<10x12xf32, #tpu.memory_space<vmem>>, vector<10x12xf32>
    %c0_1 = arith.constant 0 : index
    %c0_2 = arith.constant 0 : index
    %1 = vector.load %arg1[%c0_1, %c0_2] : memref<1x12xf32, #tpu.memory_space<vmem>>, vector<1x12xf32>
    %2 = vector.broadcast %1 : vector<1x12xf32> to vector<10x12xf32>
    %3 = arith.mulf %0, %2 : vector<10x12xf32>
    %cst = arith.constant dense<0.000000e+00> : vector<10xf32>
    %4 = vector.multi_reduction <add>, %3, %cst [1] : vector<10x12xf32> to vector<10xf32>
    %5 = vector.shape_cast %4 : vector<10xf32> to vector<10x1xf32>
    %c0_3 = arith.constant 0 : index
    %6 = memref.load %arg2[%c0_3] : memref<1xf32, #tpu.memory_space<smem>>
    %7 = vector.broadcast %6 : f32 to vector<10x1xf32>
    %8 = arith.addf %5, %7 : vector<10x1xf32>
    %c0_4 = arith.constant 0 : index
    %c0_5 = arith.constant 0 : index
    %9 = vector.load %arg4[%c0_4, %c0_5] : memref<10x1xf32, #tpu.memory_space<vmem>>, vector<10x1xf32>
    tpu.vector_store %arg4[%c0_4, %c0_5], %8 {strides = array<i32>} : memref<10x1xf32, #tpu.memory_space<vmem>>, vector<10x1xf32>,
    return
  }
}

</mosaic_0001>

<llo_original>
// kernel: tpu_custom_call.1
$region0: #{tpu_custom_call.1}
  #allocation0 [shape = 'u32[]', space=smem, size = 0x4, offset = 0x4, fixed_abs, tag = 'smem constant byte address 0x4 - core index']
  #allocation1 [shape = 'u32[72,128]{1,0:T(1,128)}', space=vmem, size = 0x9000, scoped, tag = 'internal scratch']
  #allocation2 [shape = 'f32[1]{0:T(128)S(6)}', space=smem, size = 0x200, scoped, tag = 'scoped memory for tpu_custom_call.1']
  %s0 = inlined_call_operand.vmem [shape: f32[10,12], index: 0, kind: input, shape index: {}]
  %s1 = inlined_call_operand.vmem [shape: f32[1,12], index: 1, kind: input, shape index: {}]
  %s2 = inlined_call_operand.<no memory space> [shape: f32[1], index: 2, kind: input, shape index: {}]
  %s3 = inlined_call_operand.vmem [shape: u32[10,1], index: 3, kind: input, shape index: {}]
  %s4 = inlined_call_operand.vmem [shape: f32[10,1], index: 4, kind: output, shape index: {}]
  %s5 = sld [smem:[#allocation0]]
  $region26: #{tpu_custom_call.1} parent=0
    _
  %s7 = ssub.s32 1, %s5
  %s8 = scalar_select 0, %s7, %s5
  %9 = sst [smem:[#allocation2]] %s2
  // Predicated region
  $region2: #{tpu_custom_call.1} parent=0 // pred_check
    _
  $region3: #{tpu_custom_call.1} parent=0 // pred_check_branch
    %11 = sbr.rel (0) target = $region5
  $region4: #{tpu_custom_call.1} parent=0 // pred_region
    _
  $region5: #{tpu_custom_call.1} parent=0 // pred_fallthru
    _
  // Predicated region
  $region6: #{tpu_custom_call.1} parent=0 // pred_check
    _
  $region7: #{tpu_custom_call.1} parent=0 // pred_check_branch
    %13 = sbr.rel (0) target = $region9
  $region8: #{tpu_custom_call.1} parent=0 // pred_region
    _
  $region9: #{tpu_custom_call.1} parent=0 // pred_fallthru
    _
  // Predicated region
  $region10: #{tpu_custom_call.1} parent=0 // pred_check
    _
  $region11: #{tpu_custom_call.1} parent=0 // pred_check_branch
    %15 = sbr.rel (0) target = $region13
  $region12: #{tpu_custom_call.1} parent=0 // pred_region
    _
  $region13: #{tpu_custom_call.1} parent=0 // pred_fallthru
    _
  // Predicated region
  $region14: #{tpu_custom_call.1} parent=0 // pred_check
    _
  $region15: #{tpu_custom_call.1} parent=0 // pred_check_branch
    %17 = sbr.rel (0) target = $region17
  $region16: #{tpu_custom_call.1} parent=0 // pred_region
    _
  $region17: #{tpu_custom_call.1} parent=0 // pred_fallthru
    _
  %v18 = vld [vmem:[%s0] sm:$0xff]
  %v19 = vld [vmem:[%s0 + $0x8] sm:$0x3]
  %v20 = vld [vmem:[%s1] sm:$0x1]
  %v22 = vperm.slane %v20, 0
  %v24 = vmul.f32 %v18, %v22
  %v25 = vmul.f32 %v19, %v22
  %vm26 = vcmask 97280
  %v27 = vsel %vm26, %v24, 0.0
  %28 = vadd.xlane.f32.xlu0 %v27
  %v29 = vpop.xlane.xlu0 %28
  %vm30 = vcmask 91136
  %v31 = vsel %vm30, %v25, 0.0
  %32 = vadd.xlane.f32.xlu0 %v31
  %v33 = vpop.xlane.xlu0 %32
  %s34 = sld [smem:[#allocation2]]
  %v35 = vstv %s34
  %v36 = vadd.f32 %v29, %v35
  %v37 = vadd.f32 %v33, %v35
  %vm38 = vcmask 7168
  %39 = vst.msk [vmem:[%s4] sm:$0xff] %vm38, %v36
  %vm40 = vcmask 1024
  %41 = vst.msk [vmem:[%s4 + $0x8] sm:$0x3] %vm40, %v37
  // Predicated region
  $region18: #{tpu_custom_call.1} parent=0 // pred_check
    _
  $region19: #{tpu_custom_call.1} parent=0 // pred_check_branch
    %43 = sbr.rel (0) target = $region21
  $region20: #{tpu_custom_call.1} parent=0 // pred_region
    _
  $region21: #{tpu_custom_call.1} parent=0 // pred_fallthru
    _
  // Predicated region
  $region22: #{tpu_custom_call.1} parent=0 // pred_check
    _
  $region23: #{tpu_custom_call.1} parent=0 // pred_check_branch
    %45 = sbr.rel (0) target = $region25
  $region24: #{tpu_custom_call.1} parent=0 // pred_region
    _
  $region25: #{tpu_custom_call.1} parent=0 // pred_fallthru
    _

</llo_original>
